<compile_context>
chip_gen: v6e
topology: v6e:2x2x1
jax: 0.10.0
libtpu: 0.0.40
codegen_flags: <defaults>
</compile_context>

<pallas_src>
import functools

import jax
import jax.numpy as jnp
from jax import lax
from jax.experimental import pallas as pl
from jax.experimental.pallas import tpu as pltpu


def pad_num(k_s: int) -> int:
    # Integer form of the PyTorch helper (odd kernel sizes -> 'same' padding).
    return (k_s - 1) // 2


def _dw_hardswish_kernel(x_ref, w_ref, b_ref, cm_ref, rm_ref, o_ref, *, k: int, W: int):
    """Depthwise k x k conv + bias + Hardswish on a (row-tile, HW_pad) slab.

    x_ref:  (CT, HWp)     flattened spatial planes (batch*channel rows)
    w_ref:  (k*k, CT, 1)  per-tap, per-row (= per-channel) weights
    b_ref:  (CT, 1)       per-row bias
    cm_ref: (k, 1, HWp)   column-shift boundary masks (index dj)
    rm_ref: (k, 1, HWp)   row-shift boundary masks (index di)
    o_ref:  (CT, HWp)     output slab
    """
    p = (k - 1) // 2
    HWp = x_ref.shape[1]

    x = x_ref[...].astype(jnp.float32)                       # (CT, HWp)

    # Column-shifted, column-masked copies z_e (one roll + one mul per e != 0).
    zs = []
    for dj in range(k):
        e = dj - p
        if e == 0:
            zs.append(x)
        else:
            zc = pltpu.roll(x, shift=(-e) % HWp, axis=1)      # jnp.roll semantics
            zs.append(zc * cm_ref[dj])                        # (1, HWp) sublane bcast

    # acc = sum_d rowmask_d * roll( sum_e w[d,e] * z_e , d*W )
    acc = None
    for di in range(k):
        d = di - p
        part = None
        for dj in range(k):
            t = di * k + dj
            w_t = w_ref[t].astype(jnp.float32)                # (CT, 1) lane bcast
            term = zs[dj] * w_t
            part = term if part is None else part + term
        if d != 0:
            part = pltpu.roll(part, shift=(-(d * W)) % HWp, axis=1) * rm_ref[di]
        acc = part if acc is None else acc + part

    acc = acc + b_ref[...].astype(jnp.float32)                # bias
    # Hardswish: x * relu6(x + 3) / 6
    acc = acc * jnp.clip(acc + 3.0, 0.0, 6.0) * (1.0 / 6.0)
    o_ref[...] = acc.astype(o_ref.dtype)


def _build_shift_masks(H: int, W: int, k: int, HW_pad: int):
    """Column masks (k, 1, HW_pad) and row masks (k, 1, HW_pad), float32.

    colmask[dj, 0, p] == 1  iff  column(p) + (dj - pad) is inside [0, W)
    rowmask[di, 0, p] == 1  iff  row(p)    + (di - pad) is inside [0, H)
    Positions past H*W (lane padding) are masked out everywhere.
    """
    p = pad_num(k)
    idx = jnp.arange(HW_pad, dtype=jnp.int32)
    rows = idx // W
    cols = idx % W
    in_img = idx < (H * W)
    colmasks, rowmasks = [], []
    for t in range(k):
        s = t - p
        colmasks.append((((cols + s) >= 0) & ((cols + s) < W) & in_img).astype(jnp.float32))
        rowmasks.append((((rows + s) >= 0) & ((rows + s) < H) & in_img).astype(jnp.float32))
    return (jnp.stack(colmasks, axis=0)[:, None, :],
            jnp.stack(rowmasks, axis=0)[:, None, :])


def _pick_row_tile(NC: int, HW_pad: int, itemsize: int,
                   block_budget_bytes: int = 512 * 1024) -> int:
    """Rows (batch*channel) per block.

    Must be a multiple of 8 (full sublane use) or equal to the full NC; never 1.
    The ~512 KiB budget keeps the unrolled tap chain (x + k z_e copies + acc,
    all f32) plus double-buffered in/out well inside the smallest scoped-VMEM
    default (v5e 16 MiB) and v7x's reduced physical VMEM.
    """
    cands = [d for d in range(8, NC + 1) if NC % d == 0 and d % 8 == 0]
    if not cands:
        return NC                      # NC < 8 or no multiple-of-8 divisor: one full block
    fits = [d for d in cands if d * HW_pad * itemsize <= block_budget_bytes]
    return max(fits) if fits else min(cands)   # fallback is >= 8, never 1


def dw_forward(x_nchw: jnp.ndarray, weight: jnp.ndarray, bias: jnp.ndarray,
               dw_s: int) -> jnp.ndarray:
    """Equivalent of DW(cin, dw_s).forward on NCHW input.

    weight: (cin, 1, k, k) (PyTorch depthwise layout), bias: (cin,).
    """
    N, C, H, W = x_nchw.shape
    k = int(dw_s)
    assert k % 2 == 1, "DW uses odd kernel sizes (padding = (k-1)//2)"
    kk = k * k
    HW = H * W
    HW_pad = ((HW + 127) // 128) * 128
    NC = N * C

    # Layout glue: free reshape; lane-pad only when HW is not 128-aligned.
    x_flat = x_nchw.reshape(NC, HW)
    if HW_pad != HW:
        x_flat = jnp.pad(x_flat, ((0, 0), (0, HW_pad - HW)))

    # Per-tap weights / bias replicated across batch (row r = n*C + c -> channel c).
    w_taps = jnp.transpose(weight.reshape(C, kk), (1, 0))          # (kk, C)
    w_taps = jnp.tile(w_taps, (1, N))[:, :, None]                  # (kk, NC, 1)
    b_col = jnp.tile(bias, N).reshape(NC, 1)                       # (NC, 1)
    colmasks, rowmasks = _build_shift_masks(H, W, k, HW_pad)       # (k, 1, HWp) x2

    CT = _pick_row_tile(NC, HW_pad, x_nchw.dtype.itemsize)
    grid = (NC // CT,)

    kernel = functools.partial(_dw_hardswish_kernel, k=k, W=W)

    out_flat = pl.pallas_call(
        kernel,
        out_shape=jax.ShapeDtypeStruct((NC, HW_pad), x_nchw.dtype),
        grid_spec=pltpu.PrefetchScalarGridSpec(
            num_scalar_prefetch=0,
            grid=grid,
            in_specs=[
                pl.BlockSpec((CT, HW_pad), lambda r: (r, 0)),
                pl.BlockSpec((kk, CT, 1), lambda r: (0, r, 0)),
                pl.BlockSpec((CT, 1), lambda r: (r, 0)),
                pl.BlockSpec((k, 1, HW_pad), lambda r: (0, 0, 0)),
                pl.BlockSpec((k, 1, HW_pad), lambda r: (0, 0, 0)),
            ],
            out_specs=pl.BlockSpec((CT, HW_pad), lambda r: (r, 0)),
        ),
        compiler_params=pltpu.CompilerParams(
            dimension_semantics=("parallel",)),
    )(x_flat, w_taps, b_col, colmasks, rowmasks)

    if HW_pad != HW:
        out_flat = out_flat[:, :HW]
    return out_flat.reshape(N, C, H, W)


def _reference(x_nchw, weight, bias, dw_s):
    """Pure-JAX reference (lax depthwise conv + hardswish) for validation."""
    C = x_nchw.shape[1]
    p = pad_num(dw_s)
    y = lax.conv_general_dilated(
        x_nchw, weight,
        window_strides=(1, 1),
        padding=[(p, p), (p, p)],
        dimension_numbers=("NCHW", "OIHW", "NCHW"),
        feature_group_count=C,
    ) + bias.reshape(1, C, 1, 1)
    return y * jnp.clip(y + 3.0, 0.0, 6.0) / 6.0


if __name__ == "__main__":
    # Small shapes consistent with the module: batch=2, channels=4, spatial=16.
    N, C, H, W = 2, 4, 16, 16
    key = jax.random.PRNGKey(0)
    dw_fn = jax.jit(dw_forward, static_argnums=(3,))

    for dw_s in (3, 5):
        key, kx, kw, kb = jax.random.split(key, 4)
        x = jax.random.normal(kx, (N, C, H, W), dtype=jnp.float32)
        weight = jax.random.normal(kw, (C, 1, dw_s, dw_s), dtype=jnp.float32) * 0.1
        bias = jax.random.normal(kb, (C,), dtype=jnp.float32) * 0.1

        out = jax.block_until_ready(dw_fn(x, weight, bias, dw_s))
        ref = _reference(x, weight, bias, dw_s)

        assert out.shape == (N, C, H, W)
        assert jnp.allclose(out, ref, atol=1e-4, rtol=1e-4), f"mismatch dw_s={dw_s}"

    print("KERNEL_OK")
</pallas_src>

<mosaic_0001>
module attributes {stable_mosaic.version = 11 : i64} {
  func.func @_dw_hardswish_kernel(%arg0: i32, %arg1: memref<8x256xf32, #tpu.memory_space<vmem>>, %arg2: memref<9x8x1xf32, #tpu.memory_space<vmem>>, %arg3: memref<8x1xf32, #tpu.memory_space<vmem>>, %arg4: memref<3x1x256xf32, #tpu.memory_space<vmem>>, %arg5: memref<3x1x256xf32, #tpu.memory_space<vmem>>, %arg6: memref<8x256xf32, #tpu.memory_space<vmem>>) attributes {dimension_semantics = [#tpu.dimension_semantics<parallel>], iteration_bounds = array<i64: 1>, scalar_prefetch = 0 : i64, scratch_operands = 0 : i64, tpu.core_type = #tpu.core_type<tc>, window_params = [{transform_indices = @transform_0, window_bounds = array<i64: 8, 256>}, {transform_indices = @transform_1, window_bounds = array<i64: 9, 8, 1>}, {transform_indices = @transform_2, window_bounds = array<i64: 8, 1>}, {pipeline_mode = #tpu.pipeline_mode<synchronous>, transform_indices = @transform_3, window_bounds = array<i64: 3, 1, 256>}, {pipeline_mode = #tpu.pipeline_mode<synchronous>, transform_indices = @transform_4, window_bounds = array<i64: 3, 1, 256>}, {transform_indices = @transform_5, window_bounds = array<i64: 8, 256>}]} {
    %c0 = arith.constant 0 : index
    %c0_0 = arith.constant 0 : index
    %0 = vector.load %arg1[%c0, %c0_0] : memref<8x256xf32, #tpu.memory_space<vmem>>, vector<8x256xf32>
    %c1_i32 = arith.constant 1 : i32
    %1 = tpu.dynamic_rotate %0 by %c1_i32 dim 1 : vector<8x256xf32>, i32 -> vector<8x256xf32>
    %c0_1 = arith.constant 0 : index
    %c0_2 = arith.constant 0 : index
    %c0_3 = arith.constant 0 : index
    %2 = vector.load %arg4[%c0_1, %c0_2, %c0_3] : memref<3x1x256xf32, #tpu.memory_space<vmem>>, vector<1x1x256xf32>
    %3 = vector.shape_cast %2 : vector<1x1x256xf32> to vector<1x256xf32>
    %4 = vector.broadcast %3 : vector<1x256xf32> to vector<8x256xf32>
    %5 = arith.mulf %1, %4 : vector<8x256xf32>
    %c255_i32 = arith.constant 255 : i32
    %6 = tpu.dynamic_rotate %0 by %c255_i32 dim 1 : vector<8x256xf32>, i32 -> vector<8x256xf32>
    %c2 = arith.constant 2 : index
    %c0_4 = arith.constant 0 : index
    %c0_5 = arith.constant 0 : index
    %7 = vector.load %arg4[%c2, %c0_4, %c0_5] : memref<3x1x256xf32, #tpu.memory_space<vmem>>, vector<1x1x256xf32>
    %8 = vector.shape_cast %7 : vector<1x1x256xf32> to vector<1x256xf32>
    %9 = vector.broadcast %8 : vector<1x256xf32> to vector<8x256xf32>
    %10 = arith.mulf %6, %9 : vector<8x256xf32>
    %c0_6 = arith.constant 0 : index
    %c0_7 = arith.constant 0 : index
    %c0_8 = arith.constant 0 : index
    %11 = vector.load %arg2[%c0_6, %c0_7, %c0_8] : memref<9x8x1xf32, #tpu.memory_space<vmem>>, vector<1x8x1xf32>
    %12 = vector.shape_cast %11 : vector<1x8x1xf32> to vector<8x1xf32>
    %13 = vector.broadcast %12 : vector<8x1xf32> to vector<8x256xf32>
    %14 = arith.mulf %5, %13 : vector<8x256xf32>
    %c1 = arith.constant 1 : index
    %c0_9 = arith.constant 0 : index
    %c0_10 = arith.constant 0 : index
    %15 = vector.load %arg2[%c1, %c0_9, %c0_10] : memref<9x8x1xf32, #tpu.memory_space<vmem>>, vector<1x8x1xf32>
    %16 = vector.shape_cast %15 : vector<1x8x1xf32> to vector<8x1xf32>
    %17 = vector.broadcast %16 : vector<8x1xf32> to vector<8x256xf32>
    %18 = arith.mulf %0, %17 : vector<8x256xf32>
    %19 = arith.addf %14, %18 : vector<8x256xf32>
    %c2_11 = arith.constant 2 : index
    %c0_12 = arith.constant 0 : index
    %c0_13 = arith.constant 0 : index
    %20 = vector.load %arg2[%c2_11, %c0_12, %c0_13] : memref<9x8x1xf32, #tpu.memory_space<vmem>>, vector<1x8x1xf32>
    %21 = vector.shape_cast %20 : vector<1x8x1xf32> to vector<8x1xf32>
    %22 = vector.broadcast %21 : vector<8x1xf32> to vector<8x256xf32>
    %23 = arith.mulf %10, %22 : vector<8x256xf32>
    %24 = arith.addf %19, %23 : vector<8x256xf32>
    %c16_i32 = arith.constant 16 : i32
    %25 = tpu.dynamic_rotate %24 by %c16_i32 dim 1 : vector<8x256xf32>, i32 -> vector<8x256xf32>
    %c0_14 = arith.constant 0 : index
    %c0_15 = arith.constant 0 : index
    %c0_16 = arith.constant 0 : index
    %26 = vector.load %arg5[%c0_14, %c0_15, %c0_16] : memref<3x1x256xf32, #tpu.memory_space<vmem>>, vector<1x1x256xf32>
    %27 = vector.shape_cast %26 : vector<1x1x256xf32> to vector<1x256xf32>
    %28 = vector.broadcast %27 : vector<1x256xf32> to vector<8x256xf32>
    %29 = arith.mulf %25, %28 : vector<8x256xf32>
    %c3 = arith.constant 3 : index
    %c0_17 = arith.constant 0 : index
    %c0_18 = arith.constant 0 : index
    %30 = vector.load %arg2[%c3, %c0_17, %c0_18] : memref<9x8x1xf32, #tpu.memory_space<vmem>>, vector<1x8x1xf32>
    %31 = vector.shape_cast %30 : vector<1x8x1xf32> to vector<8x1xf32>
    %32 = vector.broadcast %31 : vector<8x1xf32> to vector<8x256xf32>
    %33 = arith.mulf %5, %32 : vector<8x256xf32>
    %c4 = arith.constant 4 : index
    %c0_19 = arith.constant 0 : index
    %c0_20 = arith.constant 0 : index
    %34 = vector.load %arg2[%c4, %c0_19, %c0_20] : memref<9x8x1xf32, #tpu.memory_space<vmem>>, vector<1x8x1xf32>
    %35 = vector.shape_cast %34 : vector<1x8x1xf32> to vector<8x1xf32>
    %36 = vector.broadcast %35 : vector<8x1xf32> to vector<8x256xf32>
    %37 = arith.mulf %0, %36 : vector<8x256xf32>
    %38 = arith.addf %33, %37 : vector<8x256xf32>
    %c5 = arith.constant 5 : index
    %c0_21 = arith.constant 0 : index
    %c0_22 = arith.constant 0 : index
    %39 = vector.load %arg2[%c5, %c0_21, %c0_22] : memref<9x8x1xf32, #tpu.memory_space<vmem>>, vector<1x8x1xf32>
    %40 = vector.shape_cast %39 : vector<1x8x1xf32> to vector<8x1xf32>
    %41 = vector.broadcast %40 : vector<8x1xf32> to vector<8x256xf32>
    %42 = arith.mulf %10, %41 : vector<8x256xf32>
    %43 = arith.addf %38, %42 : vector<8x256xf32>
    %44 = arith.addf %29, %43 : vector<8x256xf32>
    %c6 = arith.constant 6 : index
    %c0_23 = arith.constant 0 : index
    %c0_24 = arith.constant 0 : index
    %45 = vector.load %arg2[%c6, %c0_23, %c0_24] : memref<9x8x1xf32, #tpu.memory_space<vmem>>, vector<1x8x1xf32>
    %46 = vector.shape_cast %45 : vector<1x8x1xf32> to vector<8x1xf32>
    %47 = vector.broadcast %46 : vector<8x1xf32> to vector<8x256xf32>
    %48 = arith.mulf %5, %47 : vector<8x256xf32>
    %c7 = arith.constant 7 : index
    %c0_25 = arith.constant 0 : index
    %c0_26 = arith.constant 0 : index
    %49 = vector.load %arg2[%c7, %c0_25, %c0_26] : memref<9x8x1xf32, #tpu.memory_space<vmem>>, vector<1x8x1xf32>
    %50 = vector.shape_cast %49 : vector<1x8x1xf32> to vector<8x1xf32>
    %51 = vector.broadcast %50 : vector<8x1xf32> to vector<8x256xf32>
    %52 = arith.mulf %0, %51 : vector<8x256xf32>
    %53 = arith.addf %48, %52 : vector<8x256xf32>
    %c8 = arith.constant 8 : index
    %c0_27 = arith.constant 0 : index
    %c0_28 = arith.constant 0 : index
    %54 = vector.load %arg2[%c8, %c0_27, %c0_28] : memref<9x8x1xf32, #tpu.memory_space<vmem>>, vector<1x8x1xf32>
    %55 = vector.shape_cast %54 : vector<1x8x1xf32> to vector<8x1xf32>
    %56 = vector.broadcast %55 : vector<8x1xf32> to vector<8x256xf32>
    %57 = arith.mulf %10, %56 : vector<8x256xf32>
    %58 = arith.addf %53, %57 : vector<8x256xf32>
    %c240_i32 = arith.constant 240 : i32
    %59 = tpu.dynamic_rotate %58 by %c240_i32 dim 1 : vector<8x256xf32>, i32 -> vector<8x256xf32>
    %c2_29 = arith.constant 2 : index
    %c0_30 = arith.constant 0 : index
    %c0_31 = arith.constant 0 : index
    %60 = vector.load %arg5[%c2_29, %c0_30, %c0_31] : memref<3x1x256xf32, #tpu.memory_space<vmem>>, vector<1x1x256xf32>
    %61 = vector.shape_cast %60 : vector<1x1x256xf32> to vector<1x256xf32>
    %62 = vector.broadcast %61 : vector<1x256xf32> to vector<8x256xf32>
    %63 = arith.mulf %59, %62 : vector<8x256xf32>
    %64 = arith.addf %44, %63 : vector<8x256xf32>
    %c0_32 = arith.constant 0 : index
    %c0_33 = arith.constant 0 : index
    %65 = vector.load %arg3[%c0_32, %c0_33] : memref<8x1xf32, #tpu.memory_space<vmem>>, vector<8x1xf32>
    %66 = vector.broadcast %65 : vector<8x1xf32> to vector<8x256xf32>
    %67 = arith.addf %64, %66 : vector<8x256xf32>
    %cst = arith.constant 3.000000e+00 : f32
    %68 = vector.broadcast %cst : f32 to vector<8x256xf32>
    %69 = arith.addf %67, %68 : vector<8x256xf32>
    %cst_34 = arith.constant 0.000000e+00 : f32
    %cst_35 = arith.constant 6.000000e+00 : f32
    %70 = vector.broadcast %cst_34 : f32 to vector<8x256xf32>
    %71 = arith.maximumf %70, %69 : vector<8x256xf32>
    %72 = vector.broadcast %cst_35 : f32 to vector<8x256xf32>
    %73 = arith.minimumf %72, %71 : vector<8x256xf32>
    %74 = arith.mulf %67, %73 : vector<8x256xf32>
    %cst_36 = arith.constant 0.166666672 : f32
    %75 = vector.broadcast %cst_36 : f32 to vector<8x256xf32>
    %76 = arith.mulf %74, %75 : vector<8x256xf32>
    %c0_37 = arith.constant 0 : index
    %c0_38 = arith.constant 0 : index
    %77 = vector.load %arg6[%c0_37, %c0_38] : memref<8x256xf32, #tpu.memory_space<vmem>>, vector<8x256xf32>
    tpu.vector_store %arg6[%c0_37, %c0_38], %76 {strides = array<i32>} : memref<8x256xf32, #tpu.memory_space<vmem>>, vector<8x256xf32>,
    return
  }
  func.func @transform_0(%arg0: i32) -> (i32, i32) {
    %c0_i32 = arith.constant 0 : i32
    %c0_i32_0 = arith.constant 0 : i32
    return %arg0, %c0_i32 : i32, i32
  }
  func.func @transform_1(%arg0: i32) -> (i32, i32, i32) {
    %c0_i32 = arith.constant 0 : i32
    %c0_i32_0 = arith.constant 0 : i32
    %c0_i32_1 = arith.constant 0 : i32
    return %c0_i32, %arg0, %c0_i32_0 : i32, i32, i32
  }
  func.func @transform_2(%arg0: i32) -> (i32, i32) {
    %c0_i32 = arith.constant 0 : i32
    %c0_i32_0 = arith.constant 0 : i32
    return %arg0, %c0_i32 : i32, i32
  }
  func.func @transform_3(%arg0: i32) -> (i32, i32, i32) {
    %c0_i32 = arith.constant 0 : i32
    %c0_i32_0 = arith.constant 0 : i32
    %c0_i32_1 = arith.constant 0 : i32
    %c0_i32_2 = arith.constant 0 : i32
    return %c0_i32, %c0_i32_0, %c0_i32_1 : i32, i32, i32
  }
  func.func @transform_4(%arg0: i32) -> (i32, i32, i32) {
    %c0_i32 = arith.constant 0 : i32
    %c0_i32_0 = arith.constant 0 : i32
    %c0_i32_1 = arith.constant 0 : i32
    %c0_i32_2 = arith.constant 0 : i32
    return %c0_i32, %c0_i32_0, %c0_i32_1 : i32, i32, i32
  }
  func.func @transform_5(%arg0: i32) -> (i32, i32) {
    %c0_i32 = arith.constant 0 : i32
    %c0_i32_0 = arith.constant 0 : i32
    return %arg0, %c0_i32 : i32, i32
  }
}

</mosaic_0001>

<llo_original>
// kernel: tile.18
$region0: #{tile.18}
  #allocation0 [shape = 's32[1]{0}', space=sflag, size = 0x4, scoped, tag = 'scoped memory for tile.18']
  %s0 = inlined_call_operand.vmem [shape: f32[4], index: 0, kind: input, shape index: {}]
  %s1 = inlined_call_operand.vmem [shape: f32[2,4], index: 1, kind: output, shape index: {}]
  // Predicated region
  $region2: #{tile.18} parent=0 // pred_check
    _
  $region3: #{tile.18} parent=0 // pred_check_branch
    %3 = sbr.rel (0) target = $region5
  $region4: #{tile.18} parent=0 // pred_region
    _
  $region5: #{tile.18} parent=0 // pred_fallthru
    _
  %v4 = vld [vmem:[%s0] ss:$0 sm:$0xff]
  %5 = vst [vmem:[%s1] sm:$0x3] %v4

// kernel: tile.0
$region0: #{tile.0}
  %s0 = inlined_call_operand.vmem [shape: f32[2,4], index: 0, kind: input, shape index: {}]
  %s1 = inlined_call_operand.vmem [shape: f32[8,1], index: 1, kind: output, shape index: {}]
  $region1: #{tile.0} parent=0
    #allocation0 [shape = 'u8[4096]{0}', space=vmem, size = 0x1000, scoped, tag = 'scoped mem for input reshape']
    %s3 = sshll.u32 1, 2
    %s4 = ssub.s32 %s3, 1
    %v5 = vld [vmem:[%s0] sm:%s4]
    %6 = vst [vmem:[#allocation0] sm:%s4] %v5
    %v7 = vld [vmem:[#allocation0] sm:$0x3]
    %vm8 = vcmask 7168
    %9 = vst.msk [vmem:[%s1] ss:$4 sm:$0x3] %vm8, %v7
    %v10 = vld [vmem:[#allocation0] sm:$0x3]
    %11 = vrot.lane.b32.xlu0 %v10, 127
    %v12 = vpop.permute.xlu0 %11
    %vm13 = vcmask 7168
    %s14 = scalar_lea.vmem %s1, 1
    %15 = vst.msk [vmem:[%s14] ss:$4 sm:$0x3] %vm13, %v12
    %v16 = vld [vmem:[#allocation0] sm:$0x3]
    %17 = vrot.lane.b32.xlu0 %v16, 126
    %v18 = vpop.permute.xlu0 %17
    %vm19 = vcmask 7168
    %s20 = scalar_lea.vmem %s1, 2
    %21 = vst.msk [vmem:[%s20] ss:$4 sm:$0x3] %vm19, %v18
    %v22 = vld [vmem:[#allocation0] sm:$0x3]
    %23 = vrot.lane.b32.xlu0 %v22, 125
    %v24 = vpop.permute.xlu0 %23
    %vm25 = vcmask 7168
    %s26 = scalar_lea.vmem %s1, 3
    %27 = vst.msk [vmem:[%s26] ss:$4 sm:$0x3] %vm25, %v24

// kernel: dw_forward.1
$region0: #{dw_forward.1}
  #allocation0 [shape = 'u32[]', space=smem, size = 0x4, offset = 0x4, fixed_abs, tag = 'smem constant byte address 0x4 - core index']
  #allocation1 [shape = 'u32[144,128]{1,0:T(1,128)}', space=vmem, size = 0x12000, scoped, tag = 'internal scratch']
  %s0 = inlined_call_operand.vmem [shape: f32[8,256], index: 0, kind: input, shape index: {}]
  %s1 = inlined_call_operand.vmem [shape: f32[9,8,1], index: 1, kind: input, shape index: {}]
  %s2 = inlined_call_operand.vmem [shape: f32[8,1], index: 2, kind: input, shape index: {}]
  %s3 = inlined_call_operand.vmem [shape: f32[3,1,256], index: 3, kind: input, shape index: {}]
  %s4 = inlined_call_operand.vmem [shape: f32[3,1,256], index: 4, kind: input, shape index: {}]
  %s5 = inlined_call_operand.vmem [shape: f32[8,256], index: 5, kind: output, shape index: {}]
  %s6 = sld [smem:[#allocation0]]
  $region30: #{dw_forward.1} parent=0
    _
  %s8 = ssub.s32 1, %s6
  %s9 = scalar_select 0, %s8, %s6
  // Predicated region
  $region2: #{dw_forward.1} parent=0 // pred_check
    _
  $region3: #{dw_forward.1} parent=0 // pred_check_branch
    %11 = sbr.rel (0) target = $region5
  $region4: #{dw_forward.1} parent=0 // pred_region
    _
  $region5: #{dw_forward.1} parent=0 // pred_fallthru
    _
  // Predicated region
  $region6: #{dw_forward.1} parent=0 // pred_check
    _
  $region7: #{dw_forward.1} parent=0 // pred_check_branch
    %13 = sbr.rel (0) target = $region9
  $region8: #{dw_forward.1} parent=0 // pred_region
    _
  $region9: #{dw_forward.1} parent=0 // pred_fallthru
    _
  // Predicated region
  $region10: #{dw_forward.1} parent=0 // pred_check
    _
  $region11: #{dw_forward.1} parent=0 // pred_check_branch
    %15 = sbr.rel (0) target = $region13
  $region12: #{dw_forward.1} parent=0 // pred_region
    _
  $region13: #{dw_forward.1} parent=0 // pred_fallthru
    _
  // Predicated region
  $region14: #{dw_forward.1} parent=0 // pred_check
    _
  $region15: #{dw_forward.1} parent=0 // pred_check_branch
    %17 = sbr.rel (0) target = $region17
  $region16: #{dw_forward.1} parent=0 // pred_region
    _
  $region17: #{dw_forward.1} parent=0 // pred_fallthru
    _
  // Predicated region
  $region18: #{dw_forward.1} parent=0 // pred_check
    _
  $region19: #{dw_forward.1} parent=0 // pred_check_branch
    %19 = sbr.rel (0) target = $region21
  $region20: #{dw_forward.1} parent=0 // pred_region
    _
  $region21: #{dw_forward.1} parent=0 // pred_fallthru
    _
  %v20 = vld [vmem:[%s0] sm:$0xff]
  %v21 = vld [vmem:[%s0 + $0x8] sm:$0xff]
  %22 = vrot.lane.b32.xlu0 %v20, 1
  %v23 = vpop.permute.xlu0 %22
  %24 = vrot.lane.b32.xlu0 %v21, 1
  %v25 = vpop.permute.xlu0 %24
  %v26 = vlaneseq
  %v27 = vand.u32 %v26, 127
  %vm28 = vcmp.lt.s32.totalorder %v27, 1
  %v29 = vsel %vm28, %v23, %v25
  %v30 = vsel %vm28, %v25, %v23
  %v31 = vld [vmem:[%s3] sm:$0x3]
  %v33 = vlaneseq
  %v34 = vshrl.u32 %v33, 7
  %v35 = vsub.s32 0, %v34
  %v36 = vrot.slane %v31, %v35
  %v37 = vlaneseq
  %v38 = vshrl.u32 %v37, 7
  %v39 = vsub.s32 1, %v38
  %v40 = vrot.slane %v31, %v39
  %v43 = vmul.f32 %v30, %v36
  %v44 = vmul.f32 %v29, %v40
  %45 = vrot.lane.b32.xlu0 %v20, 127
  %v46 = vpop.permute.xlu0 %45
  %47 = vrot.lane.b32.xlu0 %v21, 127
  %v48 = vpop.permute.xlu0 %47
  %vm49 = vcmp.lt.s32.totalorder %v27, 127
  %v50 = vsel %vm49, %v46, %v48
  %v51 = vsel %vm49, %v48, %v46
  %s52 = scalar_lea.vmem %s3, 4
  %v53 = vld [vmem:[%s52] sm:$0x3]
  %v55 = vlaneseq
  %v56 = vshrl.u32 %v55, 7
  %v57 = vsub.s32 0, %v56
  %v58 = vrot.slane %v53, %v57
  %v59 = vlaneseq
  %v60 = vshrl.u32 %v59, 7
  %v61 = vsub.s32 1, %v60
  %v62 = vrot.slane %v53, %v61
  %v65 = vmul.f32 %v50, %v58
  %v66 = vmul.f32 %v51, %v62
  %v67 = vld [vmem:[%s1] sm:$0xff]
  %69 = vset.pattern.permute.xlu0 0
  %70 = vperm.xlu0 %69, %v67
  %v71 = vpop.permute.xlu0 %70
  %v73 = vmul.f32 %v43, %v71
  %v74 = vmul.f32 %v44, %v71
  %s75 = scalar_lea.vmem %s1, 8
  %v76 = vld [vmem:[%s75] sm:$0xff]
  %78 = vset.pattern.permute.xlu0 0
  %79 = vperm.xlu0 %78, %v76
  %v80 = vpop.permute.xlu0 %79
  %v82 = vmul.f32 %v20, %v80
  %v83 = vmul.f32 %v21, %v80
  %v84 = vadd.f32 %v73, %v82
  %v85 = vadd.f32 %v74, %v83
  %s86 = scalar_lea.vmem %s1, 16
  %v87 = vld [vmem:[%s86] sm:$0xff]
  %89 = vset.pattern.permute.xlu0 0
  %90 = vperm.xlu0 %89, %v87
  %v91 = vpop.permute.xlu0 %90
  %v93 = vmul.f32 %v65, %v91
  %v94 = vmul.f32 %v66, %v91
  %v95 = vadd.f32 %v84, %v93
  %v96 = vadd.f32 %v85, %v94
  %97 = vrot.lane.b32.xlu0 %v95, 16
  %v98 = vpop.permute.xlu0 %97
  %99 = vrot.lane.b32.xlu0 %v96, 16
  %v100 = vpop.permute.xlu0 %99
  %vm101 = vcmp.lt.s32.totalorder %v27, 16
  %v102 = vsel %vm101, %v98, %v100
  %v103 = vsel %vm101, %v100, %v98
  %v104 = vld [vmem:[%s4] sm:$0x3]
  %v106 = vlaneseq
  %v107 = vshrl.u32 %v106, 7
  %v108 = vsub.s32 0, %v107
  %v109 = vrot.slane %v104, %v108
  %v110 = vlaneseq
  %v111 = vshrl.u32 %v110, 7
  %v112 = vsub.s32 1, %v111
  %v113 = vrot.slane %v104, %v112
  %v116 = vmul.f32 %v103, %v109
  %v117 = vmul.f32 %v102, %v113
  %s118 = scalar_lea.vmem %s1, 24
  %v119 = vld [vmem:[%s118] sm:$0xff]
  %121 = vset.pattern.permute.xlu0 0
  %122 = vperm.xlu0 %121, %v119
  %v123 = vpop.permute.xlu0 %122
  %v125 = vmul.f32 %v43, %v123
  %v126 = vmul.f32 %v44, %v123
  %s127 = scalar_lea.vmem %s1, 32
  %v128 = vld [vmem:[%s127] sm:$0xff]
  %130 = vset.pattern.permute.xlu0 0
  %131 = vperm.xlu0 %130, %v128
  %v132 = vpop.permute.xlu0 %131
  %v134 = vmul.f32 %v20, %v132
  %v135 = vmul.f32 %v21, %v132
  %v136 = vadd.f32 %v125, %v134
  %v137 = vadd.f32 %v126, %v135
  %s138 = scalar_lea.vmem %s1, 40
  %v139 = vld [vmem:[%s138] sm:$0xff]
  %141 = vset.pattern.permute.xlu0 0
  %142 = vperm.xlu0 %141, %v139
  %v143 = vpop.permute.xlu0 %142
  %v145 = vmul.f32 %v65, %v143
  %v146 = vmul.f32 %v66, %v143
  %v147 = vadd.f32 %v136, %v145
  %v148 = vadd.f32 %v137, %v146
  %v149 = vadd.f32 %v116, %v147
  %v150 = vadd.f32 %v117, %v148
  %s151 = scalar_lea.vmem %s1, 48
  %v152 = vld [vmem:[%s151] sm:$0xff]
  %154 = vset.pattern.permute.xlu0 0
  %155 = vperm.xlu0 %154, %v152
  %v156 = vpop.permute.xlu0 %155
  %v158 = vmul.f32 %v43, %v156
  %v159 = vmul.f32 %v44, %v156
  %s160 = scalar_lea.vmem %s1, 56
  %v161 = vld [vmem:[%s160] sm:$0xff]
  %163 = vset.pattern.permute.xlu0 0
  %164 = vperm.xlu0 %163, %v161
  %v165 = vpop.permute.xlu0 %164
  %v167 = vmul.f32 %v20, %v165
  %v168 = vmul.f32 %v21, %v165
  %v169 = vadd.f32 %v158, %v167
  %v170 = vadd.f32 %v159, %v168
  %s171 = scalar_lea.vmem %s1, 64
  %v172 = vld [vmem:[%s171] sm:$0xff]
  %174 = vset.pattern.permute.xlu0 0
  %175 = vperm.xlu0 %174, %v172
  %v176 = vpop.permute.xlu0 %175
  %v178 = vmul.f32 %v65, %v176
  %v179 = vmul.f32 %v66, %v176
  %v180 = vadd.f32 %v169, %v178
  %v181 = vadd.f32 %v170, %v179
  %182 = vrot.lane.b32.xlu0 %v180, 112
  %v183 = vpop.permute.xlu0 %182
  %184 = vrot.lane.b32.xlu0 %v181, 112
  %v185 = vpop.permute.xlu0 %184
  %vm186 = vcmp.lt.s32.totalorder %v27, 112
  %v187 = vsel %vm186, %v183, %v185
  %v188 = vsel %vm186, %v185, %v183
  %s189 = scalar_lea.vmem %s4, 4
  %v190 = vld [vmem:[%s189] sm:$0x3]
  %v192 = vlaneseq
  %v193 = vshrl.u32 %v192, 7
  %v194 = vsub.s32 0, %v193
  %v195 = vrot.slane %v190, %v194
  %v196 = vlaneseq
  %v197 = vshrl.u32 %v196, 7
  %v198 = vsub.s32 1, %v197
  %v199 = vrot.slane %v190, %v198
  %v202 = vmul.f32 %v187, %v195
  %v203 = vmul.f32 %v188, %v199
  %v204 = vadd.f32 %v149, %v202
  %v205 = vadd.f32 %v150, %v203
  %v206 = vld [vmem:[%s2] sm:$0xff]
  %208 = vset.pattern.permute.xlu0 0
  %209 = vperm.xlu0 %208, %v206
  %v210 = vpop.permute.xlu0 %209
  %v212 = vadd.f32 %v204, %v210
  %v213 = vadd.f32 %v205, %v210
  %v214 = vadd.f32 %v212, 3.0
  %v215 = vadd.f32 %v213, 3.0
  %v216 = vmax.f32 %v214, 0.0
  %v217 = vmax.f32 %v215, 0.0
  %v218 = vmin.f32 %v216, 6.0
  %v219 = vmin.f32 %v217, 6.0
  %v220 = vmul.f32 %v212, %v218
  %v221 = vmul.f32 %v213, %v219
  %v222 = vmul.f32 %v220, 0.16666667
  %v223 = vmul.f32 %v221, 0.16666667
  %224 = vst [vmem:[%s5] sm:$0xff] %v222
  %225 = vst [vmem:[%s5 + $0x8] sm:$0xff] %v223
  // Predicated region
  $region22: #{dw_forward.1} parent=0 // pred_check
    _
  $region23: #{dw_forward.1} parent=0 // pred_check_branch
    %227 = sbr.rel (0) target = $region25
  $region24: #{dw_forward.1} parent=0 // pred_region
    _
  $region25: #{dw_forward.1} parent=0 // pred_fallthru
    _
  // Predicated region
  $region26: #{dw_forward.1} parent=0 // pred_check
    _
  $region27: #{dw_forward.1} parent=0 // pred_check_branch
    %229 = sbr.rel (0) target = $region29
  $region28: #{dw_forward.1} parent=0 // pred_region
    _
  $region29: #{dw_forward.1} parent=0 // pred_fallthru
    _

</llo_original>
